<compile_context>
chip_gen: v7x
topology: tpu7x:2x2x1
jax: 0.10.0
libtpu: 0.0.40
codegen_flags: <defaults>
</compile_context>

<pallas_src>
import functools

import jax
import jax.numpy as jnp
from jax.experimental import pallas as pl
from jax.experimental.pallas import tpu as pltpu


def _round_up(x, m):
    return ((x + m - 1) // m) * m


def _pick_tm(hw, target=1024):
    """Largest row tile <= target that divides HW and is sublane-aligned (8)."""
    if hw <= target:
        return hw
    best = hw  # fall back to full extent (always a legal block)
    for d in range(8, target + 1, 8):
        if hw % d == 0:
            best = d
    return best


# ---------------------------------------------------------------------------
# Fused kernel, grid = (B, HW // TM):
#   patches_ref : (1, TM, Kp)   bf16   im2col rows for this tile
#   wc_ref      : (Kp, Cfp)     bf16   conv weight (VMEM-resident, const map)
#   bc_ref      : (1, Cfp)      f32    conv bias
#   wf_ref      : (Cfp, NLp)    f32    fc weight
#   bf_ref      : (1, NLp)      f32    fc bias
#   out_ref     : (1, 1, NLp)   f32    logits for this batch element
#   acc_ref     : (1, Cfp)      f32    pooled-sum accumulator (VMEM scratch)
# ---------------------------------------------------------------------------
def _conv_pool_fc_kernel(hw, patches_ref, wc_ref, bc_ref, wf_ref, bf_ref,
                         out_ref, acc_ref):
    m = pl.program_id(1)

    @pl.when(m == 0)
    def _init():
        acc_ref[...] = jnp.zeros_like(acc_ref)

    # conv as matmul on the MXU: (TM, Kp) bf16 @ (Kp, Cfp) bf16 -> f32 acc
    feat = jnp.dot(patches_ref[0], wc_ref[...],
                   preferred_element_type=jnp.float32)
    feat = jnp.maximum(feat + bc_ref[...], 0.0)            # bias + ReLU (f32 VPU)

    # partial global-average-pool: accumulate row sums for this tile
    acc_ref[...] += jnp.sum(feat, axis=0, keepdims=True)   # (1, Cfp)

    @pl.when(m == pl.num_programs(1) - 1)
    def _finalize():
        pooled = acc_ref[...] * (1.0 / float(hw))          # mean over HW
        logits = jnp.dot(pooled, wf_ref[...],
                         preferred_element_type=jnp.float32) + bf_ref[...]
        out_ref[0] = logits                                # (1, NLp)


# ---------------------------------------------------------------------------
# Wrapper: ImageModel.forward(image) -> logits (B, num_labels)
# ---------------------------------------------------------------------------
def image_model_forward(x_nchw, params, tm_target=1024):
    """x_nchw: (B, Cin, H, W) float32, PyTorch layout."""
    conv_w, conv_b = params["conv_w"], params["conv_b"]
    fc_w, fc_b = params["fc_w"], params["fc_b"]

    B, Cin, H, W = x_nchw.shape
    cfeat = conv_w.shape[0]
    num_labels = fc_w.shape[0]
    HW = H * W
    K = 9 * Cin

    Kp = _round_up(K, 128)
    Cfp = _round_up(cfeat, 128)
    NLp = _round_up(num_labels, 128)
    TM = _pick_tm(HW, tm_target)
    n_m = HW // TM

    # --- glue: NCHW -> NHWC, pad=1, im2col (pure reshapes/slices) -----------
    # TODO(synk): host-side im2col inflates conv-input HBM bytes ~9x; an
    # in-kernel row-band shift (manual DMA of the padded NHWC band) would cut
    # that further.  Kept host-side for clarity.
    x = jnp.transpose(x_nchw, (0, 2, 3, 1))                 # (B, H, W, Cin)
    x_pad = jnp.pad(x, ((0, 0), (1, 1), (1, 1), (0, 0)))    # (B, H+2, W+2, Cin)
    slabs = []
    for kh in range(3):
        for kw in range(3):
            slabs.append(x_pad[:, kh:kh + H, kw:kw + W, :])
    patches = jnp.concatenate(slabs, axis=-1)               # (B, H, W, 9*Cin)
    patches = patches.reshape(B, HW, K)
    # lane-pad K to a multiple of 128 and feed the MXU bf16
    patches = jnp.pad(patches, ((0, 0), (0, 0), (0, Kp - K)))
    patches = patches.astype(jnp.bfloat16)

    # conv weight (Cout, Cin, 3, 3) -> (kh, kw, Cin, Cout) -> (K, Cout), padded
    wc = jnp.transpose(conv_w, (2, 3, 1, 0)).reshape(K, cfeat)
    wc = jnp.pad(wc, ((0, Kp - K), (0, Cfp - cfeat))).astype(jnp.bfloat16)
    bc = jnp.pad(conv_b.reshape(1, cfeat),
                 ((0, 0), (0, Cfp - cfeat))).astype(jnp.float32)

    # fc weight (NL, Cfeat) -> (Cfeat, NL), zero-padded; f32 (tiny)
    wf = jnp.pad(fc_w.T, ((0, Cfp - cfeat), (0, NLp - num_labels)))
    wf = wf.astype(jnp.float32)
    bf = jnp.pad(fc_b.reshape(1, num_labels),
                 ((0, 0), (0, NLp - num_labels))).astype(jnp.float32)

    flops = 2 * B * HW * Kp * Cfp + 2 * B * Cfp * NLp
    bytes_accessed = (patches.size * 2 + wc.size * 2
                      + (bc.size + wf.size + bf.size) * 4 + B * NLp * 4)

    kernel = functools.partial(_conv_pool_fc_kernel, HW)

    logits_p = pl.pallas_call(
        kernel,
        out_shape=jax.ShapeDtypeStruct((B, 1, NLp), jnp.float32),
        grid_spec=pltpu.PrefetchScalarGridSpec(
            num_scalar_prefetch=0,
            grid=(B, n_m),
            in_specs=[
                pl.BlockSpec((1, TM, Kp), lambda b, m: (b, m, 0)),   # patches
                pl.BlockSpec((Kp, Cfp), lambda b, m: (0, 0)),        # conv w
                pl.BlockSpec((1, Cfp), lambda b, m: (0, 0)),         # conv b
                pl.BlockSpec((Cfp, NLp), lambda b, m: (0, 0)),       # fc w
                pl.BlockSpec((1, NLp), lambda b, m: (0, 0)),         # fc b
            ],
            out_specs=pl.BlockSpec((1, 1, NLp), lambda b, m: (b, 0, 0)),
            scratch_shapes=[pltpu.VMEM((1, Cfp), jnp.float32)],
        ),
        compiler_params=pltpu.CompilerParams(
            dimension_semantics=("parallel", "arbitrary")),
        cost_estimate=pl.CostEstimate(
            flops=flops, transcendentals=0, bytes_accessed=bytes_accessed),
    )(patches, wc, bc, wf, bf)

    # strip the lane padding on the label dim
    return logits_p.reshape(B, NLp)[:, :num_labels]
    # TODO(synk): self.drop (nn.Dropout) is never applied in forward(), so it
    # is intentionally not implemented here.


# ---------------------------------------------------------------------------
# Pure-JAX reference (f32) for a correctness sanity check.
# ---------------------------------------------------------------------------
def _reference_forward(x_nchw, params):
    conv_w, conv_b = params["conv_w"], params["conv_b"]
    fc_w, fc_b = params["fc_w"], params["fc_b"]
    B, Cin, H, W = x_nchw.shape
    cfeat = conv_w.shape[0]
    x = jnp.transpose(x_nchw, (0, 2, 3, 1))
    x_pad = jnp.pad(x, ((0, 0), (1, 1), (1, 1), (0, 0)))
    slabs = [x_pad[:, kh:kh + H, kw:kw + W, :] for kh in range(3) for kw in range(3)]
    patches = jnp.concatenate(slabs, axis=-1).reshape(B * H * W, 9 * Cin)
    w_mat = jnp.transpose(conv_w, (2, 3, 1, 0)).reshape(9 * Cin, cfeat)
    feat = jnp.maximum(patches @ w_mat + conv_b[None, :], 0.0)
    pooled = feat.reshape(B, H * W, cfeat).mean(axis=1)
    return pooled @ fc_w.T + fc_b[None, :]


def make_params(key, cin, cfeat, num_labels):
    k1, k2, k3, k4 = jax.random.split(key, 4)
    return {
        "conv_w": 0.1 * jax.random.normal(k1, (cfeat, cin, 3, 3), jnp.float32),
        "conv_b": 0.1 * jax.random.normal(k2, (cfeat,), jnp.float32),
        "fc_w":   0.1 * jax.random.normal(k3, (num_labels, cfeat), jnp.float32),
        "fc_b":   0.1 * jax.random.normal(k4, (num_labels,), jnp.float32),
    }


if __name__ == "__main__":
    B, Cin, H, W = 2, 4, 16, 16
    CFEAT, NUM_LABELS = 32, 8

    key = jax.random.PRNGKey(0)
    kx, kp = jax.random.split(key)
    x = jax.random.normal(kx, (B, Cin, H, W), jnp.float32)
    params = make_params(kp, Cin, CFEAT, NUM_LABELS)

    logits = image_model_forward(x, params)
    logits = jax.block_until_ready(logits)

    assert logits.shape == (B, NUM_LABELS)
    assert jnp.all(jnp.isfinite(logits))

    ref = _reference_forward(x, params)
    max_err = float(jnp.max(jnp.abs(logits - ref)))
    assert max_err < 5e-2, f"max abs error vs reference too large: {max_err}"

    print("KERNEL_OK")
</pallas_src>

<mosaic_0001>
module attributes {stable_mosaic.version = 11 : i64} {
  func.func @_conv_pool_fc_kernel(%arg0: i32, %arg1: i32, %arg2: memref<1x256x128xbf16, #tpu.memory_space<vmem>>, %arg3: memref<128x128xbf16, #tpu.memory_space<vmem>>, %arg4: memref<1x128xf32, #tpu.memory_space<vmem>>, %arg5: memref<128x128xf32, #tpu.memory_space<vmem>>, %arg6: memref<1x128xf32, #tpu.memory_space<vmem>>, %arg7: memref<1x1x128xf32, #tpu.memory_space<vmem>>, %arg8: memref<1x128xf32, #tpu.memory_space<vmem>>) attributes {dimension_semantics = [#tpu.dimension_semantics<parallel>, #tpu.dimension_semantics<arbitrary>], iteration_bounds = array<i64: 2, 1>, scalar_prefetch = 0 : i64, scratch_operands = 1 : i64, tpu.core_type = #tpu.core_type<tc>, window_params = [{transform_indices = @transform_0, window_bounds = array<i64: 1, 256, 128>}, {pipeline_mode = #tpu.pipeline_mode<synchronous>, transform_indices = @transform_1, window_bounds = array<i64: 128, 128>}, {pipeline_mode = #tpu.pipeline_mode<synchronous>, transform_indices = @transform_2, window_bounds = array<i64: 1, 128>}, {pipeline_mode = #tpu.pipeline_mode<synchronous>, transform_indices = @transform_3, window_bounds = array<i64: 128, 128>}, {pipeline_mode = #tpu.pipeline_mode<synchronous>, transform_indices = @transform_4, window_bounds = array<i64: 1, 128>}, {transform_indices = @transform_5, window_bounds = array<i64: 1, 1, 128>}]} {
    %c0_i32 = arith.constant 0 : i32
    %0 = arith.cmpi eq, %arg1, %c0_i32 : i32
    %1 = arith.extui %0 : i1 to i32
    %c0_i32_0 = arith.constant 0 : i32
    %2 = arith.cmpi ne, %1, %c0_i32_0 : i32
    scf.if %2 {
      %cst_15 = arith.constant 0.000000e+00 : f32
      %20 = vector.broadcast %cst_15 : f32 to vector<1x128xf32>
      %c0_16 = arith.constant 0 : index
      %c0_17 = arith.constant 0 : index
      %21 = vector.load %arg8[%c0_16, %c0_17] : memref<1x128xf32, #tpu.memory_space<vmem>>, vector<1x128xf32>
      tpu.vector_store %arg8[%c0_16, %c0_17], %20 {strides = array<i32>} : memref<1x128xf32, #tpu.memory_space<vmem>>, vector<1x128xf32>,
    } else {
    }
    %c0 = arith.constant 0 : index
    %c0_1 = arith.constant 0 : index
    %c0_2 = arith.constant 0 : index
    %3 = vector.load %arg2[%c0, %c0_1, %c0_2] : memref<1x256x128xbf16, #tpu.memory_space<vmem>>, vector<1x256x128xbf16>
    %4 = vector.shape_cast %3 : vector<1x256x128xbf16> to vector<256x128xbf16>
    %c0_3 = arith.constant 0 : index
    %c0_4 = arith.constant 0 : index
    %5 = vector.load %arg3[%c0_3, %c0_4] : memref<128x128xbf16, #tpu.memory_space<vmem>>, vector<128x128xbf16>
    %cst = arith.constant dense<0.000000e+00> : vector<256x128xf32>
    %6 = tpu.matmul %4, %5, %cst {dimension_numbers = #tpu.dot_dimension_numbers<[1], [0], [0], [1], [0, 0, 1, 1], [], []>} : vector<256x128xbf16>, vector<128x128xbf16>, vector<256x128xf32> -> vector<256x128xf32>
    %c0_5 = arith.constant 0 : index
    %c0_6 = arith.constant 0 : index
    %7 = vector.load %arg4[%c0_5, %c0_6] : memref<1x128xf32, #tpu.memory_space<vmem>>, vector<1x128xf32>
    %8 = vector.broadcast %7 : vector<1x128xf32> to vector<256x128xf32>
    %9 = arith.addf %6, %8 : vector<256x128xf32>
    %cst_7 = arith.constant 0.000000e+00 : f32
    %10 = vector.broadcast %cst_7 : f32 to vector<256x128xf32>
    %11 = arith.maximumf %9, %10 : vector<256x128xf32>
    %c0_8 = arith.constant 0 : index
    %c0_9 = arith.constant 0 : index
    %12 = vector.load %arg8[%c0_8, %c0_9] : memref<1x128xf32, #tpu.memory_space<vmem>>, vector<1x128xf32>
    %cst_10 = arith.constant dense<0.000000e+00> : vector<128xf32>
    %13 = vector.multi_reduction <add>, %11, %cst_10 [0] : vector<256x128xf32> to vector<128xf32>
    %14 = vector.shape_cast %13 : vector<128xf32> to vector<1x128xf32>
    %15 = arith.addf %12, %14 : vector<1x128xf32>
    %c0_11 = arith.constant 0 : index
    %c0_12 = arith.constant 0 : index
    %16 = vector.load %arg8[%c0_11, %c0_12] : memref<1x128xf32, #tpu.memory_space<vmem>>, vector<1x128xf32>
    tpu.vector_store %arg8[%c0_11, %c0_12], %15 {strides = array<i32>} : memref<1x128xf32, #tpu.memory_space<vmem>>, vector<1x128xf32>,
    %c0_i32_13 = arith.constant 0 : i32
    %17 = arith.cmpi eq, %arg1, %c0_i32_13 : i32
    %18 = arith.extui %17 : i1 to i32
    %c0_i32_14 = arith.constant 0 : i32
    %19 = arith.cmpi ne, %18, %c0_i32_14 : i32
    scf.if %19 {
      %c0_15 = arith.constant 0 : index
      %c0_16 = arith.constant 0 : index
      %20 = vector.load %arg8[%c0_15, %c0_16] : memref<1x128xf32, #tpu.memory_space<vmem>>, vector<1x128xf32>
      %cst_17 = arith.constant 3.906250e-03 : f32
      %21 = vector.broadcast %cst_17 : f32 to vector<1x128xf32>
      %22 = arith.mulf %20, %21 : vector<1x128xf32>
      %c0_18 = arith.constant 0 : index
      %c0_19 = arith.constant 0 : index
      %23 = vector.load %arg5[%c0_18, %c0_19] : memref<128x128xf32, #tpu.memory_space<vmem>>, vector<128x128xf32>
      %cst_20 = arith.constant dense<0.000000e+00> : vector<1x128xf32>
      %24 = tpu.matmul %22, %23, %cst_20 {dimension_numbers = #tpu.dot_dimension_numbers<[1], [0], [0], [1], [0, 0, 1, 1], [], []>} : vector<1x128xf32>, vector<128x128xf32>, vector<1x128xf32> -> vector<1x128xf32>
      %c0_21 = arith.constant 0 : index
      %c0_22 = arith.constant 0 : index
      %25 = vector.load %arg6[%c0_21, %c0_22] : memref<1x128xf32, #tpu.memory_space<vmem>>, vector<1x128xf32>
      %26 = arith.addf %24, %25 : vector<1x128xf32>
      %c0_23 = arith.constant 0 : index
      %c0_24 = arith.constant 0 : index
      %c0_25 = arith.constant 0 : index
      %27 = vector.load %arg7[%c0_23, %c0_24, %c0_25] : memref<1x1x128xf32, #tpu.memory_space<vmem>>, vector<1x1x128xf32>
      %28 = vector.shape_cast %27 : vector<1x1x128xf32> to vector<1x128xf32>
      %29 = vector.shape_cast %26 : vector<1x128xf32> to vector<1x1x128xf32>
      tpu.vector_store %arg7[%c0_23, %c0_24, %c0_25], %29 {strides = array<i32>} : memref<1x1x128xf32, #tpu.memory_space<vmem>>, vector<1x1x128xf32>,
    } else {
    }
    return
  }
  func.func @transform_0(%arg0: i32, %arg1: i32) -> (i32, i32, i32) {
    %c0_i32 = arith.constant 0 : i32
    %c0_i32_0 = arith.constant 0 : i32
    return %arg0, %arg1, %c0_i32 : i32, i32, i32
  }
  func.func @transform_1(%arg0: i32, %arg1: i32) -> (i32, i32) {
    %c0_i32 = arith.constant 0 : i32
    %c0_i32_0 = arith.constant 0 : i32
    %c0_i32_1 = arith.constant 0 : i32
    return %c0_i32, %c0_i32_0 : i32, i32
  }
  func.func @transform_2(%arg0: i32, %arg1: i32) -> (i32, i32) {
    %c0_i32 = arith.constant 0 : i32
    %c0_i32_0 = arith.constant 0 : i32
    %c0_i32_1 = arith.constant 0 : i32
    return %c0_i32, %c0_i32_0 : i32, i32
  }
  func.func @transform_3(%arg0: i32, %arg1: i32) -> (i32, i32) {
    %c0_i32 = arith.constant 0 : i32
    %c0_i32_0 = arith.constant 0 : i32
    %c0_i32_1 = arith.constant 0 : i32
    return %c0_i32, %c0_i32_0 : i32, i32
  }
  func.func @transform_4(%arg0: i32, %arg1: i32) -> (i32, i32) {
    %c0_i32 = arith.constant 0 : i32
    %c0_i32_0 = arith.constant 0 : i32
    %c0_i32_1 = arith.constant 0 : i32
    return %c0_i32, %c0_i32_0 : i32, i32
  }
  func.func @transform_5(%arg0: i32, %arg1: i32) -> (i32, i32, i32) {
    %c0_i32 = arith.constant 0 : i32
    %c0_i32_0 = arith.constant 0 : i32
    %c0_i32_1 = arith.constant 0 : i32
    return %arg0, %c0_i32, %c0_i32_0 : i32, i32, i32
  }
}

</mosaic_0001>

<llo_original>
// kernel: tpu_custom_call.1
$region0: #{tpu_custom_call.1}
  #allocation0 [shape = 'u32[]', space=smem, size = 0x4, offset = 0x4, fixed_abs, tag = 'smem constant byte address 0x4 - core index']
  #allocation1 [shape = 'u32[144,128]{1,0:T(1,128)}', space=vmem, size = 0x12000, scoped, tag = 'internal scratch']
  #allocation2 [shape = 'f32[1,128]{1,0:T(1,128)}', space=vmem, size = 0x200, scoped, tag = 'scratch operand']
  %s0 = inlined_call_operand.hbm [shape: bf16[2,256,128], index: 0, kind: input, shape index: {}]
  %s1 = inlined_call_operand.hbm [shape: bf16[128,128], index: 1, kind: input, shape index: {}]
  %s2 = inlined_call_operand.vmem [shape: f32[1,128], index: 2, kind: input, shape index: {}]
  %s3 = inlined_call_operand.hbm [shape: f32[128,128], index: 3, kind: input, shape index: {}]
  %s4 = inlined_call_operand.vmem [shape: f32[1,128], index: 4, kind: input, shape index: {}]
  %s5 = inlined_call_operand.hbm [shape: f32[2,1,128], index: 5, kind: output, shape index: {}]
  %s6 = sld [smem:[#allocation0]]
  $region73: #{tpu_custom_call.1} parent=0
    _
  %s8 = ssub.s32 1, %s6
  %s9 = scalar_select 0, %s8, %s6
  $region1: #{tpu_custom_call.1} parent=0
    #allocation3 [shape = 'u8[131072]{0}', space=vmem, size = 0x20000, scoped, tag = 'input window, operand 0']
    #allocation4 [shape = 's32[2]{0}', space=sflag, size = 0x8, scoped, tag = 'scoped memory for tpu_custom_call.1']
    #allocation5 [shape = 's32[2]{0}', space=sflag, size = 0x8, scoped, tag = 'scoped memory for tpu_custom_call.1']
    #allocation6 [shape = 'u8[32768]{0}', space=vmem, size = 0x8000, scoped, tag = 'input window, operand 1, single buffered']
    #allocation7 [shape = 's32[1]{0}', space=sflag, size = 0x4, scoped, tag = 'scoped memory for tpu_custom_call.1']
    #allocation8 [shape = 'u8[65536]{0}', space=vmem, size = 0x10000, scoped, tag = 'input window, operand 3, single buffered']
    #allocation9 [shape = 'u8[1024]{0}', space=vmem, size = 0x400, scoped, tag = 'output window, operand 0']
    %10 = vsyncpa [#allocation4], 0
    %s11 = scalar_lea.sflag [#allocation4], 1
    %12 = vsyncpa %s11, 0
    %13 = vsyncpa [#allocation7], 0
    %14 = vsyncpa [#allocation5], 0
    %s15 = scalar_lea.sflag [#allocation5], 1
    %16 = vsyncpa %s15, 0
    loop: start=0, step=1, limit=4
    $region2: #{tpu_custom_call.1} parent=1 // loop_pre_header
      _
    $region3: #{tpu_custom_call.1} parent=1 // loop_header
      %s18 = sphi 0, %s22
      %p19 = scmp.ge.s32.totalorder %s18, 4
      %s25 = sphi 0, %s37
      %s26 = sphi 0, %s33
      %s27 = sphi 0, %s25
      %s28 = sphi 0, %s26
      %s29 = sphi 0, %s27
      %s30 = sphi 0, %s28
      %s42 = sphi 0, %s44
      %s45 = sphi 0, %s42
      %s46 = sphi 0, %s45
      %s62 = sphi 0, %s46
      %s66 = sphi 0, %s66
      %s68 = sphi 0, %s66
      %s69 = sphi 0, %s68
      %s83 = sphi 0, %s69
      %s87 = sphi 0, %s87
      %s89 = sphi 0, %s87
      %s90 = sphi 0, %s89
      %s104 = sphi 0, %s90
      %s108 = sphi 0, %s108
      %s110 = sphi 0, %s108
      %s111 = sphi 0, %s110
      %s125 = sphi 0, %s111
      %s129 = sphi 0, %s129
      %s131 = sphi 0, %s129
      %s132 = sphi 0, %s131
      %s146 = sphi 0, %s132
      %s152 = sphi 0, %s154
      %s155 = sphi 0, %s152
      %s156 = sphi 0, %s155
      %s172 = sphi 0, %s156
    $region4: #{tpu_custom_call.1} parent=1 // loop_header_branch
      %21 = sbr.rel (%p19) target = $region8
    $region5: #{tpu_custom_call.1} parent=1 // loop_body
      %s23 = ssub.s32 %s18, 1
      %s24 = ssub.s32 %s18, 2
      %s31 = sadd.s32 1, %s26
      %p32 = scmp.ge.s32.totalorder %s31, 1
      %s33 = scalar_select %p32, 0, %s31
      %s34 = sadd.s32 1, %s25
      %s35 = scalar_select %p32, %s34, %s25
      %p36 = scmp.ge.s32.totalorder %s35, 2
      %s37 = scalar_select %p36, 0, %s35
      %s38 = ssub.s32 %s25, %s37
      %s39 = ssub.s32 %s26, %s33
      %s40 = sor.u32 %s38, %s39
      %p41 = scmp.eq.s32.totalorder %s40, 0
      %s43 = sadd.s32 %s42, 1
      %s44 = scalar_select %p41, %s42, %s43
      %p47 = pneg %p41
      %p48 = scmp.eq.s32.totalorder %s18, 1
      %p49 = por %p47, %p48
      %p50 = scmp.ne.s32.totalorder %s42, %s45
      %p51 = scmp.eq.s32.totalorder %s18, 0
      %p52 = por %p50, %p51
      %p53 = scmp.ne.s32.totalorder %s42, %s45
      %p54 = scmp.eq.s32.totalorder %s23, 1
      %p55 = por %p53, %p54
      %p56 = scmp.ne.s32.totalorder %s45, %s46
      %p57 = scmp.eq.s32.totalorder %s23, 0
      %p58 = por %p56, %p57
      %p59 = scmp.ne.s32.totalorder %s45, %s46
      %p60 = scmp.eq.s32.totalorder %s24, 1
      %p61 = por %p59, %p60
      %p63 = scmp.ne.s32.totalorder %s46, %s62
      %p64 = scmp.eq.s32.totalorder %s24, 0
      %p65 = por %p63, %p64
      %s67 = sadd.s32 %s66, 1
      %p70 = scmp.eq.s32.totalorder %s18, 1
      %p71 = scmp.ne.s32.totalorder %s66, %s68
      %p72 = scmp.eq.s32.totalorder %s18, 0
      %p73 = por %p71, %p72
      %p74 = scmp.ne.s32.totalorder %s66, %s68
      %p75 = scmp.eq.s32.totalorder %s23, 1
      %p76 = por %p74, %p75
      %p77 = scmp.ne.s32.totalorder %s68, %s69
      %p78 = scmp.eq.s32.totalorder %s23, 0
      %p79 = por %p77, %p78
      %p80 = scmp.ne.s32.totalorder %s68, %s69
      %p81 = scmp.eq.s32.totalorder %s24, 1
      %p82 = por %p80, %p81
      %p84 = scmp.ne.s32.totalorder %s69, %s83
      %p85 = scmp.eq.s32.totalorder %s24, 0
      %p86 = por %p84, %p85
      %s88 = sadd.s32 %s87, 1
      %p91 = scmp.eq.s32.totalorder %s18, 1
      %p92 = scmp.ne.s32.totalorder %s87, %s89
      %p93 = scmp.eq.s32.totalorder %s18, 0
      %p94 = por %p92, %p93
      %p95 = scmp.ne.s32.totalorder %s87, %s89
      %p96 = scmp.eq.s32.totalorder %s23, 1
      %p97 = por %p95, %p96
      %p98 = scmp.ne.s32.totalorder %s89, %s90
      %p99 = scmp.eq.s32.totalorder %s23, 0
      %p100 = por %p98, %p99
      %p101 = scmp.ne.s32.totalorder %s89, %s90
      %p102 = scmp.eq.s32.totalorder %s24, 1
      %p103 = por %p101, %p102
      %p105 = scmp.ne.s32.totalorder %s90, %s104
      %p106 = scmp.eq.s32.totalorder %s24, 0
      %p107 = por %p105, %p106
      %s109 = sadd.s32 %s108, 1
      %p112 = scmp.eq.s32.totalorder %s18, 1
      %p113 = scmp.ne.s32.totalorder %s108, %s110
      %p114 = scmp.eq.s32.totalorder %s18, 0
      %p115 = por %p113, %p114
      %p116 = scmp.ne.s32.totalorder %s108, %s110
      %p117 = scmp.eq.s32.totalorder %s23, 1
      %p118 = por %p116, %p117
      %p119 = scmp.ne.s32.totalorder %s110, %s111
      %p120 = scmp.eq.s32.totalorder %s23, 0
      %p121 = por %p119, %p120
      %p122 = scmp.ne.s32.totalorder %s110, %s111
      %p123 = scmp.eq.s32.totalorder %s24, 1
      %p124 = por %p122, %p123
      %p126 = scmp.ne.s32.totalorder %s111, %s125
      %p127 = scmp.eq.s32.totalorder %s24, 0
      %p128 = por %p126, %p127
      %s130 = sadd.s32 %s129, 1
      %p133 = scmp.eq.s32.totalorder %s18, 1
      %p134 = scmp.ne.s32.totalorder %s129, %s131
      %p135 = scmp.eq.s32.totalorder %s18, 0
      %p136 = por %p134, %p135
      %p137 = scmp.ne.s32.totalorder %s129, %s131
      %p138 = scmp.eq.s32.totalorder %s23, 1
      %p139 = por %p137, %p138
      %p140 = scmp.ne.s32.totalorder %s131, %s132
      %p141 = scmp.eq.s32.totalorder %s23, 0
      %p142 = por %p140, %p141
      %p143 = scmp.ne.s32.totalorder %s131, %s132
      %p144 = scmp.eq.s32.totalorder %s24, 1
      %p145 = por %p143, %p144
      %p147 = scmp.ne.s32.totalorder %s132, %s146
      %p148 = scmp.eq.s32.totalorder %s24, 0
      %p149 = por %p147, %p148
      %s150 = ssub.s32 %s25, %s37
      %p151 = scmp.eq.s32.totalorder %s150, 0
      %s153 = sadd.s32 %s152, 1
      %s154 = scalar_select %p151, %s152, %s153
      %p157 = pneg %p151
      %p158 = scmp.eq.s32.totalorder %s18, 1
      %p159 = por %p157, %p158
      %p160 = scmp.ne.s32.totalorder %s152, %s155
      %p161 = scmp.eq.s32.totalorder %s18, 0
      %p162 = por %p160, %p161
      %p163 = scmp.ne.s32.totalorder %s152, %s155
      %p164 = scmp.eq.s32.totalorder %s23, 1
      %p165 = por %p163, %p164
      %p166 = scmp.ne.s32.totalorder %s155, %s156
      %p167 = scmp.eq.s32.totalorder %s23, 0
      %p168 = por %p166, %p167
      %p169 = scmp.ne.s32.totalorder %s155, %s156
      %p170 = scmp.eq.s32.totalorder %s24, 1
      %p171 = por %p169, %p170
      %p173 = scmp.ne.s32.totalorder %s156, %s172
      %p174 = scmp.eq.s32.totalorder %s24, 0
      %p175 = por %p173, %p174
      %p176 = scmp.le.s32.totalorder 1, %s18
      %p177 = scmp.lt.s32.totalorder %s18, 3
      %p178 = pnand %p176, %p177
      %p179 = pneg %p178
      // Predicated region
      $region9: #{tpu_custom_call.1} parent=5 // pred_check
        _
      $region10: #{tpu_custom_call.1} parent=5 // pred_check_branch
        %181 = sbr.rel (%p178) target = $region12
      $region11: #{tpu_custom_call.1} parent=5 // pred_region
        %s182 = ssub.s32 %s18, 1
        // Predicated region
        $region13: #{tpu_custom_call.1} parent=11 // pred_check
          %p183 = pneg %p79
        $region14: #{tpu_custom_call.1} parent=11 // pred_check_branch
          %185 = sbr.rel (%p183) target = $region16
        $region15: #{tpu_custom_call.1} parent=11 // pred_region
          %s187 = ssub.s32 1024, 1024
          %188 = vsyncadd [#allocation7], %s187
          %s189 = sshll.u32 [#allocation6], 4
          %s190 = int_to_ptr.vmem [resolvable:$true] %s189
          %195 = dma.hbm_to_vmem [thread:$0]  %s1, 1024, %s190, [#allocation7], 64, 64, 4
        $region16: #{tpu_custom_call.1} parent=11 // pred_fallthru
          _
        // Predicated region
        $region17: #{tpu_custom_call.1} parent=11 // pred_check
          %p196 = pneg %p100
        $region18: #{tpu_custom_call.1} parent=11 // pred_check_branch
          %198 = sbr.rel (%p196) target = $region20
        $region19: #{tpu_custom_call.1} parent=11 // pred_region
          _
        $region20: #{tpu_custom_call.1} parent=11 // pred_fallthru
          _
        // Predicated region
        $region21: #{tpu_custom_call.1} parent=11 // pred_check
          %p199 = pneg %p121
        $region22: #{tpu_custom_call.1} parent=11 // pred_check_branch
          %201 = sbr.rel (%p199) target = $region24
        $region23: #{tpu_custom_call.1} parent=11 // pred_region
          %s203 = ssub.s32 2048, 2048
          %204 = vsyncadd [#allocation7], %s203
          %s205 = sshll.u32 [#allocation8], 4
          %s206 = int_to_ptr.vmem [resolvable:$true] %s205
          %211 = dma.hbm_to_vmem [thread:$0]  %s3, 2048, %s206, [#allocation7], 128, 128, 8
        $region24: #{tpu_custom_call.1} parent=11 // pred_fallthru
          _
        // Predicated region
        $region25: #{tpu_custom_call.1} parent=11 // pred_check
          %p212 = pneg %p142
        $region26: #{tpu_custom_call.1} parent=11 // pred_check_branch
          %214 = sbr.rel (%p212) target = $region28
        $region27: #{tpu_custom_call.1} parent=11 // pred_region
          _
        $region28: #{tpu_custom_call.1} parent=11 // pred_fallthru
          _
      $region12: #{tpu_custom_call.1} parent=5 // pred_fallthru
        _
      %p215 = scmp.lt.s32.totalorder %s18, 2
      // Predicated region
      $region29: #{tpu_custom_call.1} parent=5 // pred_check
        %p216 = pneg %p215
      $region30: #{tpu_custom_call.1} parent=5 // pred_check_branch
        %218 = sbr.rel (%p216) target = $region32
      $region31: #{tpu_custom_call.1} parent=5 // pred_region
        // Predicated region
        $region33: #{tpu_custom_call.1} parent=31 // pred_check
          %p219 = pneg %p52
        $region34: #{tpu_custom_call.1} parent=31 // pred_check_branch
          %221 = sbr.rel (%p219) target = $region36
        $region35: #{tpu_custom_call.1} parent=31 // pred_region
          %s222 = sand.u32 %s42, 1
          %s223 = scalar_lea.sflag [#allocation4], %s222
          %s224 = sand.u32 %s42, 1
          %s225 = smul.addr %s224, 128
          %s226 = scalar_lea.vmem [#allocation3], %s225
          %s227 = smul.u32 32, %s26
          %s229 = ssub.s32 2048, 2048
          %230 = vsyncadd %s223, %s229
          %s231 = smul.addr %s25, 32
          %s232 = sadd.s32 %s227, %s231
          %s233 = smul.addr %s232, 64
          %s234 = scalar_lea.hbm %s0, %s233
          %s235 = sshll.u32 %s226, 4
          %s236 = int_to_ptr.vmem [resolvable:$true] %s235
          %241 = dma.hbm_to_vmem [thread:$0]  %s234, 2048, %s236, %s223, 64, 64, 4
        $region36: #{tpu_custom_call.1} parent=31 // pred_fallthru
          _
      $region32: #{tpu_custom_call.1} parent=5 // pred_fallthru
        _
      %p242 = scmp.le.s32.totalorder 1, %s18
      %p243 = scmp.lt.s32.totalorder %s18, 3
      %p244 = pnand %p242, %p243
      %p245 = pneg %p244
      // Predicated region
      $region37: #{tpu_custom_call.1} parent=5 // pred_check
        _
      $region38: #{tpu_custom_call.1} parent=5 // pred_check_branch
        %247 = sbr.rel (%p244) target = $region40
      $region39: #{tpu_custom_call.1} parent=5 // pred_region
        %s248 = ssub.s32 %s18, 1
        %s249 = sand.u32 %s45, 1
        %s250 = scalar_lea.sflag [#allocation4], %s249
        %s251 = sand.u32 %s45, 1
        %s252 = smul.addr %s251, 128
        %s253 = scalar_lea.vmem [#allocation3], %s252
        // Predicated region
        $region41: #{tpu_custom_call.1} parent=39 // pred_check
          %p254 = pneg %p58
        $region42: #{tpu_custom_call.1} parent=39 // pred_check_branch
          %256 = sbr.rel (%p254) target = $region44
        $region43: #{tpu_custom_call.1} parent=39 // pred_region
          %257 = dma.done %s250, 2048
        $region44: #{tpu_custom_call.1} parent=39 // pred_fallthru
          _
        // Predicated region
        $region45: #{tpu_custom_call.1} parent=39 // pred_check
          %p258 = pneg %p79
        $region46: #{tpu_custom_call.1} parent=39 // pred_check_branch
          %260 = sbr.rel (%p258) target = $region48
        $region47: #{tpu_custom_call.1} parent=39 // pred_region
          %261 = dma.done [#allocation7], 1024
        $region48: #{tpu_custom_call.1} parent=39 // pred_fallthru
          _
        // Predicated region
        $region49: #{tpu_custom_call.1} parent=39 // pred_check
          %p262 = pneg %p121
        $region50: #{tpu_custom_call.1} parent=39 // pred_check_branch
          %264 = sbr.rel (%p262) target = $region52
        $region51: #{tpu_custom_call.1} parent=39 // pred_region
          %265 = dma.done [#allocation7], 2048
        $region52: #{tpu_custom_call.1} parent=39 // pred_fallthru
          _
        %s266 = sand.u32 %s45, 1
        %s267 = scalar_lea.sflag [#allocation4], %s266
        %s268 = sand.u32 %s45, 1
        %s269 = smul.addr %s268, 128
        %s270 = scalar_lea.vmem [#allocation3], %s269
        %p271 = pneg %p58
        %p272 = pneg %p55
        %p273 = pneg %p79
        %p274 = pneg %p76
        %p275 = pneg %p100
        %p276 = pneg %p97
        %p277 = pneg %p121
        %p278 = pneg %p118
        %p279 = pneg %p142
        %p280 = pneg %p139
        %p281 = pneg %p168
        %p282 = pneg %p165
        %s283 = sand.u32 %s155, 1
        %s284 = scalar_lea.sflag [#allocation5], %s283
        %s285 = sand.u32 %s155, 1
        %s286 = scalar_lea.vmem [#allocation9], %s285
        %s287 = smul.u32 32, %s28
        %p289 = scmp.eq.s32.totalorder %s28, 0
        // Predicated region
        $region53: #{tpu_custom_call.1} parent=39 // pred_check
          %p290 = pneg %p289
        $region54: #{tpu_custom_call.1} parent=39 // pred_check_branch
          %292 = sbr.rel (%p290) target = $region56
        $region55: #{tpu_custom_call.1} parent=39 // pred_region
          %293 = vst [vmem:[#allocation2] sm:$0x1] 0.0
        $region56: #{tpu_custom_call.1} parent=39 // pred_fallthru
          _
        %v294 = vld [vmem:[%s253] sm:$0xf]
        %v295 = vld [vmem:[%s253 + $0x4] sm:$0xf]
        %v296 = vld [vmem:[%s253 + $0x8] sm:$0xf]
        %v297 = vld [vmem:[%s253 + $0xc] sm:$0xf]
        %v298 = vld [vmem:[%s253 + $0x10] sm:$0xf]
        %v299 = vld [vmem:[%s253 + $0x14] sm:$0xf]
        %v300 = vld [vmem:[%s253 + $0x18] sm:$0xf]
        %v301 = vld [vmem:[%s253 + $0x1c] sm:$0xf]
        %v302 = vld [vmem:[%s253 + $0x20] sm:$0xf]
        %v303 = vld [vmem:[%s253 + $0x24] sm:$0xf]
        %v304 = vld [vmem:[%s253 + $0x28] sm:$0xf]
        %v305 = vld [vmem:[%s253 + $0x2c] sm:$0xf]
        %v306 = vld [vmem:[%s253 + $0x30] sm:$0xf]
        %v307 = vld [vmem:[%s253 + $0x34] sm:$0xf]
        %v308 = vld [vmem:[%s253 + $0x38] sm:$0xf]
        %v309 = vld [vmem:[%s253 + $0x3c] sm:$0xf]
        %v310 = vld [vmem:[%s253 + $0x40] sm:$0xf]
        %v311 = vld [vmem:[%s253 + $0x44] sm:$0xf]
        %v312 = vld [vmem:[%s253 + $0x48] sm:$0xf]
        %v313 = vld [vmem:[%s253 + $0x4c] sm:$0xf]
        %v314 = vld [vmem:[%s253 + $0x50] sm:$0xf]
        %v315 = vld [vmem:[%s253 + $0x54] sm:$0xf]
        %v316 = vld [vmem:[%s253 + $0x58] sm:$0xf]
        %v317 = vld [vmem:[%s253 + $0x5c] sm:$0xf]
        %v318 = vld [vmem:[%s253 + $0x60] sm:$0xf]
        %v319 = vld [vmem:[%s253 + $0x64] sm:$0xf]
        %v320 = vld [vmem:[%s253 + $0x68] sm:$0xf]
        %v321 = vld [vmem:[%s253 + $0x6c] sm:$0xf]
        %v322 = vld [vmem:[%s253 + $0x70] sm:$0xf]
        %v323 = vld [vmem:[%s253 + $0x74] sm:$0xf]
        %v324 = vld [vmem:[%s253 + $0x78] sm:$0xf]
        %v325 = vld [vmem:[%s253 + $0x7c] sm:$0xf]
        %v326 = vld [vmem:[#allocation6] sm:$0xf]
        %v327 = vld [vmem:[#allocation6 + $0x4] sm:$0xf]
        %v328 = vld [vmem:[#allocation6 + $0x8] sm:$0xf]
        %v329 = vld [vmem:[#allocation6 + $0xc] sm:$0xf]
        %v330 = vld [vmem:[#allocation6 + $0x10] sm:$0xf]
        %v331 = vld [vmem:[#allocation6 + $0x14] sm:$0xf]
        %v332 = vld [vmem:[#allocation6 + $0x18] sm:$0xf]
        %v333 = vld [vmem:[#allocation6 + $0x1c] sm:$0xf]
        %v334 = vld [vmem:[#allocation6 + $0x20] sm:$0xf]
        %v335 = vld [vmem:[#allocation6 + $0x24] sm:$0xf]
        %v336 = vld [vmem:[#allocation6 + $0x28] sm:$0xf]
        %v337 = vld [vmem:[#allocation6 + $0x2c] sm:$0xf]
        %v338 = vld [vmem:[#allocation6 + $0x30] sm:$0xf]
        %v339 = vld [vmem:[#allocation6 + $0x34] sm:$0xf]
        %v340 = vld [vmem:[#allocation6 + $0x38] sm:$0xf]
        %v341 = vld [vmem:[#allocation6 + $0x3c] sm:$0xf]
        %v342 = vld [vmem:[%s2] sm:$0x1]
        %v344 = vlaneseq
        %v345 = vshrl.u32 %v344, 7
        %v346 = vsub.s32 0, %v345
        %v347 = vrot.slane %v342, %v346
        %v381 = vunpack.c.l.b16 %v294
        %v382 = vunpack.c.l.b16 %v295
        %v383 = vunpack.c.l.b16 %v296
        %v384 = vunpack.c.l.b16 %v297
        %v385 = vunpack.c.l.b16 %v298
        %v386 = vunpack.c.l.b16 %v299
        %v387 = vunpack.c.l.b16 %v300
        %v388 = vunpack.c.l.b16 %v301
        %v389 = vunpack.c.l.b16 %v302
        %v390 = vunpack.c.l.b16 %v303
        %v391 = vunpack.c.l.b16 %v304
        %v392 = vunpack.c.l.b16 %v305
        %v393 = vunpack.c.l.b16 %v306
        %v394 = vunpack.c.l.b16 %v307
        %v395 = vunpack.c.l.b16 %v308
        %v396 = vunpack.c.l.b16 %v309
        %v397 = vunpack.c.l.b16 %v310
        %v398 = vunpack.c.l.b16 %v311
        %v399 = vunpack.c.l.b16 %v312
        %v400 = vunpack.c.l.b16 %v313
        %v401 = vunpack.c.l.b16 %v314
        %v402 = vunpack.c.l.b16 %v315
        %v403 = vunpack.c.l.b16 %v316
        %v404 = vunpack.c.l.b16 %v317
        %v405 = vunpack.c.l.b16 %v318
        %v406 = vunpack.c.l.b16 %v319
        %v407 = vunpack.c.l.b16 %v320
        %v408 = vunpack.c.l.b16 %v321
        %v409 = vunpack.c.l.b16 %v322
        %v410 = vunpack.c.l.b16 %v323
        %v411 = vunpack.c.l.b16 %v324
        %v412 = vunpack.c.l.b16 %v325
        %v413 = vpack.c.b16 %v382, %v381
        %v414 = vpack.c.b16 %v384, %v383
        %v415 = vpack.c.b16 %v386, %v385
        %v416 = vpack.c.b16 %v388, %v387
        %v417 = vpack.c.b16 %v390, %v389
        %v418 = vpack.c.b16 %v392, %v391
        %v419 = vpack.c.b16 %v394, %v393
        %v420 = vpack.c.b16 %v396, %v395
        %v421 = vpack.c.b16 %v398, %v397
        %v422 = vpack.c.b16 %v400, %v399
        %v423 = vpack.c.b16 %v402, %v401
        %v424 = vpack.c.b16 %v404, %v403
        %v425 = vpack.c.b16 %v406, %v405
        %v426 = vpack.c.b16 %v408, %v407
        %v427 = vpack.c.b16 %v410, %v409
        %v428 = vpack.c.b16 %v412, %v411
        %v461 = vunpack.c.l.b16 %v326
        %v462 = vunpack.c.l.b16 %v327
        %v463 = vunpack.c.l.b16 %v328
        %v464 = vunpack.c.l.b16 %v329
        %v465 = vunpack.c.l.b16 %v330
        %v466 = vunpack.c.l.b16 %v331
        %v467 = vunpack.c.l.b16 %v332
        %v468 = vunpack.c.l.b16 %v333
        %v469 = vunpack.c.l.b16 %v334
        %v470 = vunpack.c.l.b16 %v335
        %v471 = vunpack.c.l.b16 %v336
        %v472 = vunpack.c.l.b16 %v337
        %v473 = vunpack.c.l.b16 %v338
        %v474 = vunpack.c.l.b16 %v339
        %v475 = vunpack.c.l.b16 %v340
        %v476 = vunpack.c.l.b16 %v341
        %v477 = vpack.c.b16 %v462, %v461
        %v478 = vpack.c.b16 %v464, %v463
        %v479 = vpack.c.b16 %v466, %v465
        %v480 = vpack.c.b16 %v468, %v467
        %v481 = vpack.c.b16 %v470, %v469
        %v482 = vpack.c.b16 %v472, %v471
        %v483 = vpack.c.b16 %v474, %v473
        %v484 = vpack.c.b16 %v476, %v475
        %493 = vmatprep.subr.bf16.mxu0 0
        %494 = vmatpush1.bf16.msra.mxu0 %v477
        %495 = vmatprep.subr.bf16.mxu0 0
        %496 = vmatpush1.bf16.msra.mxu0 %v478
        %497 = vmatprep.subr.bf16.mxu0 0
        %498 = vmatpush1.bf16.msra.mxu0 %v479
        %499 = vmatprep.subr.bf16.mxu0 0
        %500 = vmatpush1.bf16.msra.mxu0 %v480
        %501 = vmatprep.subr.bf16.mxu0 0
        %502 = vmatpush1.bf16.msra.mxu0 %v481
        %503 = vmatprep.subr.bf16.mxu0 0
        %504 = vmatpush1.bf16.msra.mxu0 %v482
        %505 = vmatprep.subr.bf16.mxu0 0
        %506 = vmatpush1.bf16.msra.mxu0 %v483
        %507 = vmatprep.subr.bf16.mxu0 0
        %508 = vmatpush1.bf16.msra.mxu0 %v484
        %509 = vmatprep.subr.bf16.mxu0 0
        %510 = vmatpush1.bf16.msra.mxu0 0
        %511 = vmatprep.subr.bf16.mxu0 0
        %512 = vmatpush1.bf16.msra.mxu0 0
        %513 = vmatprep.subr.bf16.mxu0 0
        %514 = vmatpush1.bf16.msra.mxu0 0
        %515 = vmatprep.subr.bf16.mxu0 0
        %516 = vmatpush1.bf16.msra.mxu0 0
        %517 = vmatprep.subr.bf16.mxu0 0
        %518 = vmatpush1.bf16.msra.mxu0 0
        %519 = vmatprep.subr.bf16.mxu0 0
        %520 = vmatpush1.bf16.msra.mxu0 0
        %521 = vmatprep.subr.bf16.mxu0 0
        %522 = vmatpush1.bf16.msra.mxu0 0
        %523 = vmatprep.subr.bf16.mxu0 0
        %524 = vmatpush1.bf16.msra.mxu0 0
        %525 = vmatprep.mubr.bf16.mxu0 0
        %526 = vmatmul.mubr.bf16.gmra.mrb[0].mxu0 %v413
        %v527 = vpop.f32.mrb[0].mxu0
        %v528 = vadd.f32 %v347, %v527
        %v529 = vpop.f32.mrb[0].mxu0
        %v530 = vpop.f32.mrb[0].mxu0
        %v531 = vadd.f32 %v347, %v530
        %v532 = vpop.f32.mrb[0].mxu0
        %533 = vmatprep.mubr.bf16.mxu0 0
        %534 = vmatmul.mubr.bf16.gmra.mrb[0].mxu0 %v414
        %v535 = vpop.f32.mrb[0].mxu0
        %v536 = vadd.f32 %v347, %v535
        %v537 = vpop.f32.mrb[0].mxu0
        %v538 = vpop.f32.mrb[0].mxu0
        %v539 = vadd.f32 %v347, %v538
        %v540 = vpop.f32.mrb[0].mxu0
        %541 = vmatprep.mubr.bf16.mxu0 0
        %542 = vmatmul.mubr.bf16.gmra.mrb[0].mxu0 %v415
        %v543 = vpop.f32.mrb[0].mxu0
        %v544 = vadd.f32 %v347, %v543
        %v545 = vpop.f32.mrb[0].mxu0
        %v546 = vpop.f32.mrb[0].mxu0
        %v547 = vadd.f32 %v347, %v546
        %v548 = vpop.f32.mrb[0].mxu0
        %549 = vmatprep.mubr.bf16.mxu0 0
        %550 = vmatmul.mubr.bf16.gmra.mrb[0].mxu0 %v416
        %v551 = vpop.f32.mrb[0].mxu0
        %v552 = vadd.f32 %v347, %v551
        %v553 = vpop.f32.mrb[0].mxu0
        %v554 = vpop.f32.mrb[0].mxu0
        %v555 = vadd.f32 %v347, %v554
        %v556 = vpop.f32.mrb[0].mxu0
        %557 = vmatprep.mubr.bf16.mxu0 0
        %558 = vmatmul.mubr.bf16.gmra.mrb[0].mxu0 %v417
        %v559 = vpop.f32.mrb[0].mxu0
        %v560 = vadd.f32 %v347, %v559
        %v561 = vpop.f32.mrb[0].mxu0
        %v562 = vpop.f32.mrb[0].mxu0
        %v563 = vadd.f32 %v347, %v562
        %v564 = vpop.f32.mrb[0].mxu0
        %565 = vmatprep.mubr.bf16.mxu0 0
        %566 = vmatmul.mubr.bf16.gmra.mrb[0].mxu0 %v418
        %v567 = vpop.f32.mrb[0].mxu0
        %v568 = vadd.f32 %v347, %v567
        %v569 = vpop.f32.mrb[0].mxu0
        %v570 = vpop.f32.mrb[0].mxu0
        %v571 = vadd.f32 %v347, %v570
        %v572 = vpop.f32.mrb[0].mxu0
        %573 = vmatprep.mubr.bf16.mxu0 0
        %574 = vmatmul.mubr.bf16.gmra.mrb[0].mxu0 %v419
        %v575 = vpop.f32.mrb[0].mxu0
        %v576 = vadd.f32 %v347, %v575
        %v577 = vpop.f32.mrb[0].mxu0
        %v578 = vpop.f32.mrb[0].mxu0
        %v579 = vadd.f32 %v347, %v578
        %v580 = vpop.f32.mrb[0].mxu0
        %581 = vmatprep.mubr.bf16.mxu0 0
        %582 = vmatmul.mubr.bf16.gmra.mrb[0].mxu0 %v420
        %v583 = vpop.f32.mrb[0].mxu0
        %v584 = vadd.f32 %v347, %v583
        %v585 = vpop.f32.mrb[0].mxu0
        %v586 = vpop.f32.mrb[0].mxu0
        %v587 = vadd.f32 %v347, %v586
        %v588 = vpop.f32.mrb[0].mxu0
        %589 = vmatprep.mubr.bf16.mxu0 0
        %590 = vmatmul.mubr.bf16.gmra.mrb[0].mxu0 %v421
        %v591 = vpop.f32.mrb[0].mxu0
        %v592 = vadd.f32 %v347, %v591
        %v593 = vpop.f32.mrb[0].mxu0
        %v594 = vpop.f32.mrb[0].mxu0
        %v595 = vadd.f32 %v347, %v594
        %v596 = vpop.f32.mrb[0].mxu0
        %597 = vmatprep.mubr.bf16.mxu0 0
        %598 = vmatmul.mubr.bf16.gmra.mrb[0].mxu0 %v422
        %v599 = vpop.f32.mrb[0].mxu0
        %v600 = vadd.f32 %v347, %v599
        %v601 = vpop.f32.mrb[0].mxu0
        %v602 = vpop.f32.mrb[0].mxu0
        %v603 = vadd.f32 %v347, %v602
        %v604 = vpop.f32.mrb[0].mxu0
        %605 = vmatprep.mubr.bf16.mxu0 0
        %606 = vmatmul.mubr.bf16.gmra.mrb[0].mxu0 %v423
        %v607 = vpop.f32.mrb[0].mxu0
        %v608 = vadd.f32 %v347, %v607
        %v609 = vpop.f32.mrb[0].mxu0
        %v610 = vpop.f32.mrb[0].mxu0
        %v611 = vadd.f32 %v347, %v610
        %v612 = vpop.f32.mrb[0].mxu0
        %613 = vmatprep.mubr.bf16.mxu0 0
        %614 = vmatmul.mubr.bf16.gmra.mrb[0].mxu0 %v424
        %v615 = vpop.f32.mrb[0].mxu0
        %v616 = vadd.f32 %v347, %v615
        %v617 = vpop.f32.mrb[0].mxu0
        %v618 = vpop.f32.mrb[0].mxu0
        %v619 = vadd.f32 %v347, %v618
        %v620 = vpop.f32.mrb[0].mxu0
        %621 = vmatprep.mubr.bf16.mxu0 0
        %622 = vmatmul.mubr.bf16.gmra.mrb[0].mxu0 %v425
        %v623 = vpop.f32.mrb[0].mxu0
        %v624 = vadd.f32 %v347, %v623
        %v625 = vpop.f32.mrb[0].mxu0
        %v626 = vpop.f32.mrb[0].mxu0
        %v627 = vadd.f32 %v347, %v626
        %v628 = vpop.f32.mrb[0].mxu0
        %629 = vmatprep.mubr.bf16.mxu0 0
        %630 = vmatmul.mubr.bf16.gmra.mrb[0].mxu0 %v426
        %v631 = vpop.f32.mrb[0].mxu0
        %v632 = vadd.f32 %v347, %v631
        %v633 = vpop.f32.mrb[0].mxu0
        %v634 = vpop.f32.mrb[0].mxu0
        %v635 = vadd.f32 %v347, %v634
        %v636 = vpop.f32.mrb[0].mxu0
        %637 = vmatprep.mubr.bf16.mxu0 0
        %638 = vmatmul.mubr.bf16.gmra.mrb[0].mxu0 %v427
        %v639 = vpop.f32.mrb[0].mxu0
        %v640 = vadd.f32 %v347, %v639
        %v641 = vpop.f32.mrb[0].mxu0
        %v642 = vpop.f32.mrb[0].mxu0
        %v643 = vadd.f32 %v347, %v642
        %v644 = vpop.f32.mrb[0].mxu0
        %645 = vmatprep.mubr.bf16.mxu0 0
        %646 = vmatmul.mubr.bf16.gmra.mrb[0].mxu0 %v428
        %v647 = vpop.f32.mrb[0].mxu0
        %v648 = vadd.f32 %v347, %v647
        %v649 = vpop.f32.mrb[0].mxu0
        %v650 = vpop.f32.mrb[0].mxu0
        %v651 = vadd.f32 %v347, %v650
        %v652 = vpop.f32.mrb[0].mxu0
        %653 = vdwg.mxu0
        %v654 = vmax.f32 %v528, 0.0
        %v655 = vmax.f32 %v531, 0.0
        %v656 = vmax.f32 %v536, 0.0
        %v657 = vmax.f32 %v539, 0.0
        %v658 = vmax.f32 %v544, 0.0
        %v659 = vmax.f32 %v547, 0.0
        %v660 = vmax.f32 %v552, 0.0
        %v661 = vmax.f32 %v555, 0.0
        %v662 = vmax.f32 %v560, 0.0
        %v663 = vmax.f32 %v563, 0.0
        %v664 = vmax.f32 %v568, 0.0
        %v665 = vmax.f32 %v571, 0.0
        %v666 = vmax.f32 %v576, 0.0
        %v667 = vmax.f32 %v579, 0.0
        %v668 = vmax.f32 %v584, 0.0
        %v669 = vmax.f32 %v587, 0.0
        %v670 = vmax.f32 %v592, 0.0
        %v671 = vmax.f32 %v595, 0.0
        %v672 = vmax.f32 %v600, 0.0
        %v673 = vmax.f32 %v603, 0.0
        %v674 = vmax.f32 %v608, 0.0
        %v675 = vmax.f32 %v611, 0.0
        %v676 = vmax.f32 %v616, 0.0
        %v677 = vmax.f32 %v619, 0.0
        %v678 = vmax.f32 %v624, 0.0
        %v679 = vmax.f32 %v627, 0.0
        %v680 = vmax.f32 %v632, 0.0
        %v681 = vmax.f32 %v635, 0.0
        %v682 = vmax.f32 %v640, 0.0
        %v683 = vmax.f32 %v643, 0.0
        %v684 = vmax.f32 %v648, 0.0
        %v685 = vmax.f32 %v651, 0.0
        %v686 = vld [vmem:[#allocation2] sm:$0x1]
        %v687 = vadd.f32 %v654, %v655
        %v688 = vadd.f32 %v687, %v656
        %v689 = vadd.f32 %v688, %v657
        %v690 = vadd.f32 %v689, %v658
        %v691 = vadd.f32 %v690, %v659
        %v692 = vadd.f32 %v691, %v660
        %v693 = vadd.f32 %v692, %v661
        %v694 = vadd.f32 %v693, %v662
        %v695 = vadd.f32 %v694, %v663
        %v696 = vadd.f32 %v695, %v664
        %v697 = vadd.f32 %v696, %v665
        %v698 = vadd.f32 %v697, %v666
        %v699 = vadd.f32 %v698, %v667
        %v700 = vadd.f32 %v699, %v668
        %v701 = vadd.f32 %v700, %v669
        %v702 = vadd.f32 %v701, %v670
        %v703 = vadd.f32 %v702, %v671
        %v704 = vadd.f32 %v703, %v672
        %v705 = vadd.f32 %v704, %v673
        %v706 = vadd.f32 %v705, %v674
        %v707 = vadd.f32 %v706, %v675
        %v708 = vadd.f32 %v707, %v676
        %v709 = vadd.f32 %v708, %v677
        %v710 = vadd.f32 %v709, %v678
        %v711 = vadd.f32 %v710, %v679
        %v712 = vadd.f32 %v711, %v680
        %v713 = vadd.f32 %v712, %v681
        %v714 = vadd.f32 %v713, %v682
        %v715 = vadd.f32 %v714, %v683
        %v716 = vadd.f32 %v715, %v684
        %v717 = vadd.f32 %v716, %v685
        %v718 = vrot.slane %v717, 4
        %v719 = vadd.f32 %v717, %v718
        %v720 = vrot.slane %v719, 2
        %v721 = vadd.f32 %v719, %v720
        %v722 = vrot.slane %v721, 1
        %v723 = vadd.f32 %v721, %v722
        %v724 = vadd.f32 %v686, %v723
        %725 = vst [vmem:[#allocation2] sm:$0x1] %v724
        // Predicated region
        $region57: #{tpu_custom_call.1} parent=39 // pred_check
          %p726 = pneg %p289
        $region58: #{tpu_custom_call.1} parent=39 // pred_check_branch
          %728 = sbr.rel (%p726) target = $region60
        $region59: #{tpu_custom_call.1} parent=39 // pred_region
          %v729 = vld [vmem:[#allocation2] sm:$0x1]
          %v730 = vmul.f32 %v729, 0.00390625
          %v731 = vld [vmem:[#allocation8] sm:$0xff]
          %v732 = vld [vmem:[#allocation8 + $0x8] sm:$0xff]
          %v733 = vld [vmem:[#allocation8 + $0x10] sm:$0xff]
          %v734 = vld [vmem:[#allocation8 + $0x18] sm:$0xff]
          %v735 = vld [vmem:[#allocation8 + $0x20] sm:$0xff]
          %v736 = vld [vmem:[#allocation8 + $0x28] sm:$0xff]
          %v737 = vld [vmem:[#allocation8 + $0x30] sm:$0xff]
          %v738 = vld [vmem:[#allocation8 + $0x38] sm:$0xff]
          %v739 = vld [vmem:[#allocation8 + $0x40] sm:$0xff]
          %v740 = vld [vmem:[#allocation8 + $0x48] sm:$0xff]
          %v741 = vld [vmem:[#allocation8 + $0x50] sm:$0xff]
          %v742 = vld [vmem:[#allocation8 + $0x58] sm:$0xff]
          %v743 = vld [vmem:[#allocation8 + $0x60] sm:$0xff]
          %v744 = vld [vmem:[#allocation8 + $0x68] sm:$0xff]
          %v745 = vld [vmem:[#allocation8 + $0x70] sm:$0xff]
          %v746 = vld [vmem:[#allocation8 + $0x78] sm:$0xff]
          %v747 = vld [vmem:[%s4] sm:$0x1]
          %748 = vmatprep.subr.mxu0 0.0
          %749 = vmatpush1.msra.mxu0 %v731
          %750 = vmatprep.subr.mxu0 0.0
          %751 = vmatpush1.msra.mxu0 %v732
          %752 = vmatprep.subr.mxu0 0.0
          %753 = vmatpush1.msra.mxu0 %v733
          %754 = vmatprep.subr.mxu0 0.0
          %755 = vmatpush1.msra.mxu0 %v734
          %756 = vmatprep.subr.mxu0 0.0
          %757 = vmatpush1.msra.mxu0 %v735
          %758 = vmatprep.subr.mxu0 0.0
          %759 = vmatpush1.msra.mxu0 %v736
          %760 = vmatprep.subr.mxu0 0.0
          %761 = vmatpush1.msra.mxu0 %v737
          %762 = vmatprep.subr.mxu0 0.0
          %763 = vmatpush1.msra.mxu0 %v738
          %764 = vmatprep.subr.mxu0 0.0
          %765 = vmatpush1.msra.mxu0 %v739
          %766 = vmatprep.subr.mxu0 0.0
          %767 = vmatpush1.msra.mxu0 %v740
          %768 = vmatprep.subr.mxu0 0.0
          %769 = vmatpush1.msra.mxu0 %v741
          %770 = vmatprep.subr.mxu0 0.0
          %771 = vmatpush1.msra.mxu0 %v742
          %772 = vmatprep.subr.mxu0 0.0
          %773 = vmatpush1.msra.mxu0 %v743
          %774 = vmatprep.subr.mxu0 0.0
          %775 = vmatpush1.msra.mxu0 %v744
          %776 = vmatprep.subr.mxu0 0.0
          %777 = vmatpush1.msra.mxu0 %v745
          %778 = vmatprep.subr.mxu0 0.0
          %779 = vmatpush1.msra.mxu0 %v746
          %780 = vmatprep.subr.mxu0 0.0
          %781 = vmatpush1.msra.mxu0 0.0
          %782 = vmatprep.subr.mxu0 0.0
          %783 = vmatpush1.msra.mxu0 0.0
          %784 = vmatprep.subr.mxu0 0.0
          %785 = vmatpush1.msra.mxu0 0.0
          %786 = vmatprep.subr.mxu0 0.0
          %787 = vmatpush1.msra.mxu0 0.0
          %788 = vmatprep.subr.mxu0 0.0
          %789 = vmatpush1.msra.mxu0 0.0
          %790 = vmatprep.subr.mxu0 0.0
          %791 = vmatpush1.msra.mxu0 0.0
          %792 = vmatprep.subr.mxu0 0.0
          %793 = vmatpush1.msra.mxu0 0.0
          %794 = vmatprep.subr.mxu0 0.0
          %795 = vmatpush1.msra.mxu0 0.0
          %796 = vmatprep.subr.mxu0 0.0
          %797 = vmatpush1.msra.mxu0 0.0
          %798 = vmatprep.subr.mxu0 0.0
          %799 = vmatpush1.msra.mxu0 0.0
          %800 = vmatprep.subr.mxu0 0.0
          %801 = vmatpush1.msra.mxu0 0.0
          %802 = vmatprep.subr.mxu0 0.0
          %803 = vmatpush1.msra.mxu0 0.0
          %804 = vmatprep.subr.mxu0 0.0
          %805 = vmatpush1.msra.mxu0 0.0
          %806 = vmatprep.subr.mxu0 0.0
          %807 = vmatpush1.msra.mxu0 0.0
          %808 = vmatprep.subr.mxu0 0.0
          %809 = vmatpush1.msra.mxu0 0.0
          %810 = vmatprep.subr.mxu0 0.0
          %811 = vmatpush1.msra.mxu0 0.0
          %812 = vmatprep.mubr.f32.mxu0 0.0
          %813 = vmatmul.mubr.f32.gmra.mrb[0].mxu0 %v730
          %v814 = vpop.f32.mrb[0].mxu0
          %v815 = vadd.f32 %v747, %v814
          %v816 = vpop.f32.mrb[0].mxu0
          %817 = vdwg.mxu0
          %818 = vst [vmem:[%s286] sm:$0x1] %v815
        $region60: #{tpu_custom_call.1} parent=39 // pred_fallthru
          _
        %s819 = sand.u32 %s155, 1
        %s820 = scalar_lea.sflag [#allocation5], %s819
        %s821 = sand.u32 %s155, 1
        %s822 = scalar_lea.vmem [#allocation9], %s821
        // Predicated region
        $region61: #{tpu_custom_call.1} parent=39 // pred_check
          %p823 = pneg %p165
        $region62: #{tpu_custom_call.1} parent=39 // pred_check_branch
          %825 = sbr.rel (%p823) target = $region64
        $region63: #{tpu_custom_call.1} parent=39 // pred_region
          %s827 = ssub.s32 16, 16
          %828 = vsyncadd %s820, %s827
          %s829 = smul.addr %s27, 16
          %s830 = scalar_lea.hbm %s5, %s829
          %s832 = sshll.u32 %s822, 4
          %s833 = int_to_ptr.vmem [resolvable:$true] %s832
          %835 = dma.vmem_to_hbm [thread:$0]  %s833, 16, %s830, %s820
        $region64: #{tpu_custom_call.1} parent=39 // pred_fallthru
          _
      $region40: #{tpu_custom_call.1} parent=5 // pred_fallthru
        _
      %p836 = scmp.le.s32.totalorder 2, %s18
      // Predicated region
      $region65: #{tpu_custom_call.1} parent=5 // pred_check
        %p837 = pneg %p836
      $region66: #{tpu_custom_call.1} parent=5 // pred_check_branch
        %839 = sbr.rel (%p837) target = $region68
      $region67: #{tpu_custom_call.1} parent=5 // pred_region
        %s840 = ssub.s32 %s18, 2
        // Predicated region
        $region69: #{tpu_custom_call.1} parent=67 // pred_check
          %p841 = pneg %p171
        $region70: #{tpu_custom_call.1} parent=67 // pred_check_branch
          %843 = sbr.rel (%p841) target = $region72
        $region71: #{tpu_custom_call.1} parent=67 // pred_region
          %s844 = sand.u32 %s156, 1
          %s845 = scalar_lea.sflag [#allocation5], %s844
          %s846 = sand.u32 %s156, 1
          %s847 = scalar_lea.vmem [#allocation9], %s846
          %848 = dma.done %s845, 16
        $region72: #{tpu_custom_call.1} parent=67 // pred_fallthru
          _
      $region68: #{tpu_custom_call.1} parent=5 // pred_fallthru
        _
    $region6: #{tpu_custom_call.1} parent=1 // loop_footer
      %s22 = sadd.s32 1, %s18
    $region7: #{tpu_custom_call.1} parent=1 // loop_footer_branch
      %17 = sbr.rel target = $region3
    $region8: #{tpu_custom_call.1} parent=1 // loop_exit
      _
    %849 = vsyncpa [#allocation4], 1
    %s850 = scalar_lea.sflag [#allocation4], 1
    %851 = vsyncpa %s850, 1
    %852 = vsyncpa [#allocation7], 1
    %853 = vsyncpa [#allocation5], 1
    %s854 = scalar_lea.sflag [#allocation5], 1
    %855 = vsyncpa %s854, 1

</llo_original>
